<compile_context>
chip_gen: v7x
topology: tpu7x:2x2x1
jax: 0.10.0
libtpu: 0.0.40
codegen_flags: <defaults>
</compile_context>

<pallas_src>
import functools

import jax
import jax.numpy as jnp
from jax.experimental import pallas as pl
from jax.experimental.pallas import tpu as pltpu


def _round_up(x, m):
    return ((x + m - 1) // m) * m


def _mlp_fused_kernel(x_ref, *refs, trunk_acts, head_widths, head_acts):
    """Fused trunk (Linear+act per layer) + combined-head Linear (+ per-head act).

    refs = (trunk_w_refs..., w_head_ref, bias_cat_ref, out_ref)
    bias_cat_ref holds all biases concatenated along the feature axis:
      [b_trunk0 | b_trunk1 | ... | b_head_all]
    """
    n_trunk = len(trunk_acts)
    w_refs = refs[:n_trunk]
    wh_ref = refs[n_trunk]
    b_ref = refs[n_trunk + 1]
    o_ref = refs[n_trunk + 2]

    b = b_ref[...]                                  # (1, sum of all out dims)
    y = x_ref[...]

    off = 0
    for w_ref, act in zip(w_refs, trunk_acts):
        d = w_ref.shape[1]
        y = jnp.dot(y, w_ref[...], preferred_element_type=jnp.float32)
        y = y + b[:, off:off + d]                   # (1, d) broadcasts over batch
        if act == "relu":
            y = jnp.maximum(y, 0.0)
        elif act is not None:
            raise ValueError(f"unsupported activation: {act}")
        off += d

    dh = wh_ref.shape[1]
    h = jnp.dot(y, wh_ref[...], preferred_element_type=jnp.float32)
    h = h + b[:, off:off + dh]

    # Per-head activation on static column slices, then one combined store.
    if all(a is None for a in head_acts):
        h_act = h
    elif all(a == "relu" for a in head_acts):
        h_act = jnp.maximum(h, 0.0)
    else:
        parts = []
        c = 0
        for w, act in zip(head_widths, head_acts):
            seg = h[:, c:c + w]
            if act == "relu":
                seg = jnp.maximum(seg, 0.0)
            elif act is not None:
                raise ValueError(f"unsupported head activation: {act}")
            parts.append(seg)
            c += w
        h_act = jnp.concatenate(parts, axis=-1)

    o_ref[...] = h_act.astype(o_ref.dtype)


# ----------------------------------------------------------------------------
# Parameter construction (deterministic, PyTorch nn.Linear-style uniform init)
# ----------------------------------------------------------------------------
def _init_linear(key, fan_in, fan_out, dtype=jnp.float32):
    kw, kb = jax.random.split(key)
    bound = 1.0 / jnp.sqrt(jnp.asarray(fan_in, dtype))
    w = jax.random.uniform(kw, (fan_in, fan_out), dtype, -bound, bound)
    b = jax.random.uniform(kb, (fan_out,), dtype, -bound, bound)
    return w, b


def make_mlp_params(key, layer_sizes, head_sizes, dtype=jnp.float32):
    # NOTE: on v6e/v7x, bf16 storage (dtype=jnp.bfloat16) halves weight DMA;
    # accumulation stays f32 via preferred_element_type in the kernel.
    params = {"trunk": [], "heads": []}
    keys = jax.random.split(key, len(layer_sizes) - 1 + len(head_sizes))
    k_idx = 0
    for j, k in zip(layer_sizes[:-1], layer_sizes[1:]):
        params["trunk"].append(_init_linear(keys[k_idx], j, k, dtype))
        k_idx += 1
    h_n = layer_sizes[-1]
    for h in head_sizes:
        params["heads"].append(_init_linear(keys[k_idx], h_n, h, dtype))
        k_idx += 1
    return params


# ----------------------------------------------------------------------------
# Fully fused MLP forward: one pallas_call for trunk + all heads.
# Returns a single tensor if one head, otherwise a list (DistParams).
# ----------------------------------------------------------------------------
def mlp_forward(params, x, trunk_activations, head_activations):
    trunk_ws = [w for (w, _) in params["trunk"]]
    trunk_bs = [b for (_, b) in params["trunk"]]
    head_ws = [w for (w, _) in params["heads"]]
    head_bs = [b for (_, b) in params["heads"]]
    head_widths = [int(w.shape[1]) for w in head_ws]

    # Combined head projection: (h_n, sum(head_sizes)).
    w_head = jnp.concatenate(head_ws, axis=1)
    # All biases in one tiny vector: [trunk biases..., head biases...].
    b_cat = jnp.concatenate(trunk_bs + head_bs, axis=0).reshape(1, -1)

    B, Din = x.shape
    Dout = sum(head_widths)

    # Batch tiling: multiple of 8 (f32 sublane), capped at 128 per grid step.
    tb = min(128, _round_up(B, 8))
    Bp = _round_up(B, tb)
    x_p = jnp.pad(x, ((0, Bp - B), (0, 0))) if Bp != B else x
    grid = (Bp // tb,)

    kernel = functools.partial(
        _mlp_fused_kernel,
        trunk_acts=tuple(trunk_activations),
        head_widths=tuple(head_widths),
        head_acts=tuple(head_activations),
    )

    in_specs = [pl.BlockSpec((tb, Din), lambda i: (i, 0))]
    for w in trunk_ws:
        in_specs.append(pl.BlockSpec(w.shape, lambda i: (0, 0)))       # VMEM-resident
    in_specs.append(pl.BlockSpec(w_head.shape, lambda i: (0, 0)))      # VMEM-resident
    in_specs.append(pl.BlockSpec(b_cat.shape, lambda i: (0, 0)))       # VMEM-resident

    flops = 2 * Bp * (sum(int(w.shape[0]) * int(w.shape[1]) for w in trunk_ws)
                      + int(w_head.shape[0]) * int(w_head.shape[1]))
    bytes_accessed = 4 * (x_p.size + sum(w.size for w in trunk_ws)
                          + w_head.size + b_cat.size + Bp * Dout)

    out = pl.pallas_call(
        kernel,
        out_shape=jax.ShapeDtypeStruct((Bp, Dout), x.dtype),
        grid=grid,
        in_specs=in_specs,
        out_specs=pl.BlockSpec((tb, Dout), lambda i: (i, 0)),
        compiler_params=pltpu.CompilerParams(
            dimension_semantics=("parallel",)),
        cost_estimate=pl.CostEstimate(
            flops=int(flops), transcendentals=0, bytes_accessed=int(bytes_accessed)),
    )(x_p, *trunk_ws, w_head, b_cat)

    out = out[:B]
    heads = []
    c = 0
    for w in head_widths:
        heads.append(out[:, c:c + w])
        c += w
    if len(heads) == 1:
        return heads[0]
    return heads


if __name__ == "__main__":
    layer_sizes = [16, 32, 32]
    trunk_activations = ["relu", "relu"]
    head_sizes = [8, 8]
    head_activations = [None, "relu"]

    key = jax.random.PRNGKey(0)
    k_params, k_x = jax.random.split(key)
    params = make_mlp_params(k_params, layer_sizes, head_sizes)

    batch = 8
    x = jax.random.normal(k_x, (batch, layer_sizes[0]), jnp.float32)

    out = mlp_forward(params, x, trunk_activations, head_activations)
    out = jax.block_until_ready(out)

    # Pure-JAX reference check.
    def ref_forward(params, x):
        y = x
        for (w, b), act in zip(params["trunk"], trunk_activations):
            y = y @ w + b
            if act == "relu":
                y = jnp.maximum(y, 0.0)
        heads = []
        for (w, b), act in zip(params["heads"], head_activations):
            h = y @ w + b
            if act == "relu":
                h = jnp.maximum(h, 0.0)
            heads.append(h)
        return heads

    ref = ref_forward(params, x)
    for o, r in zip(out, ref):
        assert o.shape == r.shape and o.dtype == r.dtype
        assert jnp.allclose(o, r, atol=1e-5, rtol=1e-5)

    print("KERNEL_OK")
</pallas_src>

<mosaic_0001>
module attributes {stable_mosaic.version = 11 : i64} {
  func.func @_mlp_fused_kernel(%arg0: i32, %arg1: memref<8x16xf32, #tpu.memory_space<vmem>>, %arg2: memref<16x32xf32, #tpu.memory_space<vmem>>, %arg3: memref<32x32xf32, #tpu.memory_space<vmem>>, %arg4: memref<32x16xf32, #tpu.memory_space<vmem>>, %arg5: memref<1x80xf32, #tpu.memory_space<vmem>>, %arg6: memref<8x16xf32, #tpu.memory_space<vmem>>) attributes {dimension_semantics = [#tpu.dimension_semantics<parallel>], iteration_bounds = array<i64: 1>, scalar_prefetch = 0 : i64, scratch_operands = 0 : i64, tpu.core_type = #tpu.core_type<tc>, window_params = [{transform_indices = @transform_0, window_bounds = array<i64: 8, 16>}, {pipeline_mode = #tpu.pipeline_mode<synchronous>, transform_indices = @transform_1, window_bounds = array<i64: 16, 32>}, {pipeline_mode = #tpu.pipeline_mode<synchronous>, transform_indices = @transform_2, window_bounds = array<i64: 32, 32>}, {pipeline_mode = #tpu.pipeline_mode<synchronous>, transform_indices = @transform_3, window_bounds = array<i64: 32, 16>}, {pipeline_mode = #tpu.pipeline_mode<synchronous>, transform_indices = @transform_4, window_bounds = array<i64: 1, 80>}, {transform_indices = @transform_5, window_bounds = array<i64: 8, 16>}]} {
    %c0 = arith.constant 0 : index
    %c0_0 = arith.constant 0 : index
    %0 = vector.load %arg5[%c0, %c0_0] : memref<1x80xf32, #tpu.memory_space<vmem>>, vector<1x80xf32>
    %c0_1 = arith.constant 0 : index
    %c0_2 = arith.constant 0 : index
    %1 = vector.load %arg1[%c0_1, %c0_2] : memref<8x16xf32, #tpu.memory_space<vmem>>, vector<8x16xf32>
    %c0_3 = arith.constant 0 : index
    %c0_4 = arith.constant 0 : index
    %2 = vector.load %arg2[%c0_3, %c0_4] : memref<16x32xf32, #tpu.memory_space<vmem>>, vector<16x32xf32>
    %cst = arith.constant dense<0.000000e+00> : vector<8x32xf32>
    %3 = tpu.matmul %1, %2, %cst {dimension_numbers = #tpu.dot_dimension_numbers<[1], [0], [0], [1], [0, 0, 1, 1], [], []>} : vector<8x16xf32>, vector<16x32xf32>, vector<8x32xf32> -> vector<8x32xf32>
    %4 = vector.extract_strided_slice %0 {offsets = [0, 0], sizes = [1, 32], strides = [1, 1]} : vector<1x80xf32> to vector<1x32xf32>
    %5 = vector.broadcast %4 : vector<1x32xf32> to vector<8x32xf32>
    %6 = arith.addf %3, %5 : vector<8x32xf32>
    %cst_5 = arith.constant 0.000000e+00 : f32
    %7 = vector.broadcast %cst_5 : f32 to vector<8x32xf32>
    %8 = arith.maximumf %6, %7 : vector<8x32xf32>
    %c0_6 = arith.constant 0 : index
    %c0_7 = arith.constant 0 : index
    %9 = vector.load %arg3[%c0_6, %c0_7] : memref<32x32xf32, #tpu.memory_space<vmem>>, vector<32x32xf32>
    %cst_8 = arith.constant dense<0.000000e+00> : vector<8x32xf32>
    %10 = tpu.matmul %8, %9, %cst_8 {dimension_numbers = #tpu.dot_dimension_numbers<[1], [0], [0], [1], [0, 0, 1, 1], [], []>} : vector<8x32xf32>, vector<32x32xf32>, vector<8x32xf32> -> vector<8x32xf32>
    %11 = vector.extract_strided_slice %0 {offsets = [0, 32], sizes = [1, 32], strides = [1, 1]} : vector<1x80xf32> to vector<1x32xf32>
    %12 = vector.broadcast %11 : vector<1x32xf32> to vector<8x32xf32>
    %13 = arith.addf %10, %12 : vector<8x32xf32>
    %cst_9 = arith.constant 0.000000e+00 : f32
    %14 = vector.broadcast %cst_9 : f32 to vector<8x32xf32>
    %15 = arith.maximumf %13, %14 : vector<8x32xf32>
    %c0_10 = arith.constant 0 : index
    %c0_11 = arith.constant 0 : index
    %16 = vector.load %arg4[%c0_10, %c0_11] : memref<32x16xf32, #tpu.memory_space<vmem>>, vector<32x16xf32>
    %cst_12 = arith.constant dense<0.000000e+00> : vector<8x16xf32>
    %17 = tpu.matmul %15, %16, %cst_12 {dimension_numbers = #tpu.dot_dimension_numbers<[1], [0], [0], [1], [0, 0, 1, 1], [], []>} : vector<8x32xf32>, vector<32x16xf32>, vector<8x16xf32> -> vector<8x16xf32>
    %18 = vector.extract_strided_slice %0 {offsets = [0, 64], sizes = [1, 16], strides = [1, 1]} : vector<1x80xf32> to vector<1x16xf32>
    %19 = vector.broadcast %18 : vector<1x16xf32> to vector<8x16xf32>
    %20 = arith.addf %17, %19 : vector<8x16xf32>
    %21 = vector.extract_strided_slice %20 {offsets = [0, 0], sizes = [8, 8], strides = [1, 1]} : vector<8x16xf32> to vector<8x8xf32>
    %22 = vector.extract_strided_slice %20 {offsets = [0, 8], sizes = [8, 8], strides = [1, 1]} : vector<8x16xf32> to vector<8x8xf32>
    %cst_13 = arith.constant 0.000000e+00 : f32
    %23 = vector.broadcast %cst_13 : f32 to vector<8x8xf32>
    %24 = arith.maximumf %22, %23 : vector<8x8xf32>
    %25 = tpu.concatenate %21, %24 in 1 : vector<8x8xf32>, vector<8x8xf32> -> vector<8x16xf32>
    %c0_14 = arith.constant 0 : index
    %c0_15 = arith.constant 0 : index
    %26 = vector.load %arg6[%c0_14, %c0_15] : memref<8x16xf32, #tpu.memory_space<vmem>>, vector<8x16xf32>
    tpu.vector_store %arg6[%c0_14, %c0_15], %25 {strides = array<i32>} : memref<8x16xf32, #tpu.memory_space<vmem>>, vector<8x16xf32>,
    return
  }
  func.func @transform_0(%arg0: i32) -> (i32, i32) {
    %c0_i32 = arith.constant 0 : i32
    %c0_i32_0 = arith.constant 0 : i32
    return %arg0, %c0_i32 : i32, i32
  }
  func.func @transform_1(%arg0: i32) -> (i32, i32) {
    %c0_i32 = arith.constant 0 : i32
    %c0_i32_0 = arith.constant 0 : i32
    %c0_i32_1 = arith.constant 0 : i32
    return %c0_i32, %c0_i32_0 : i32, i32
  }
  func.func @transform_2(%arg0: i32) -> (i32, i32) {
    %c0_i32 = arith.constant 0 : i32
    %c0_i32_0 = arith.constant 0 : i32
    %c0_i32_1 = arith.constant 0 : i32
    return %c0_i32, %c0_i32_0 : i32, i32
  }
  func.func @transform_3(%arg0: i32) -> (i32, i32) {
    %c0_i32 = arith.constant 0 : i32
    %c0_i32_0 = arith.constant 0 : i32
    %c0_i32_1 = arith.constant 0 : i32
    return %c0_i32, %c0_i32_0 : i32, i32
  }
  func.func @transform_4(%arg0: i32) -> (i32, i32) {
    %c0_i32 = arith.constant 0 : i32
    %c0_i32_0 = arith.constant 0 : i32
    %c0_i32_1 = arith.constant 0 : i32
    return %c0_i32, %c0_i32_0 : i32, i32
  }
  func.func @transform_5(%arg0: i32) -> (i32, i32) {
    %c0_i32 = arith.constant 0 : i32
    %c0_i32_0 = arith.constant 0 : i32
    return %arg0, %c0_i32 : i32, i32
  }
}

</mosaic_0001>

<llo_original>
// kernel: tpu_custom_call.1
$region0: #{tpu_custom_call.1}
  #allocation0 [shape = 'u32[]', space=smem, size = 0x4, offset = 0x4, fixed_abs, tag = 'smem constant byte address 0x4 - core index']
  #allocation1 [shape = 'u32[144,128]{1,0:T(1,128)}', space=vmem, size = 0x12000, scoped, tag = 'internal scratch']
  %s0 = inlined_call_operand.hbm [shape: f32[8,16], index: 0, kind: input, shape index: {}]
  %s1 = inlined_call_operand.vmem [shape: f32[16,32], index: 1, kind: input, shape index: {}]
  %s2 = inlined_call_operand.vmem [shape: f32[32,32], index: 2, kind: input, shape index: {}]
  %s3 = inlined_call_operand.vmem [shape: f32[32,16], index: 3, kind: input, shape index: {}]
  %s4 = inlined_call_operand.vmem [shape: f32[1,80], index: 4, kind: input, shape index: {}]
  %s5 = inlined_call_operand.hbm [shape: f32[8,16], index: 5, kind: output, shape index: {}]
  %s6 = sld [smem:[#allocation0]]
  $region34: #{tpu_custom_call.1} parent=0
    _
  %s8 = ssub.s32 1, %s6
  %s9 = scalar_select 0, %s8, %s6
  $region1: #{tpu_custom_call.1} parent=0
    #allocation2 [shape = 'u8[4096]{0}', space=vmem, size = 0x1000, scoped, tag = 'input window, operand 0, single buffered']
    #allocation3 [shape = 's32[1]{0}', space=sflag, size = 0x4, scoped, tag = 'scoped memory for tpu_custom_call.1']
    #allocation4 [shape = 's32[1]{0}', space=sflag, size = 0x4, scoped, tag = 'scoped memory for tpu_custom_call.1']
    #allocation5 [shape = 'u8[4096]{0}', space=vmem, size = 0x1000, scoped, tag = 'output window, operand 0, single buffered']
    %10 = vsyncpa [#allocation3], 0
    %11 = vsyncpa [#allocation4], 0
    // Predicated region
    $region2: #{tpu_custom_call.1} parent=1 // pred_check
      _
    $region3: #{tpu_custom_call.1} parent=1 // pred_check_branch
      %13 = sbr.rel (0) target = $region5
    $region4: #{tpu_custom_call.1} parent=1 // pred_region
      %s15 = ssub.s32 128, 128
      %16 = vsyncadd [#allocation3], %s15
      %s18 = sshll.u32 [#allocation2], 4
      %s19 = int_to_ptr.vmem [resolvable:$true] %s18
      %21 = dma.hbm_to_vmem [thread:$0]  %s0, 128, %s19, [#allocation3]
    $region5: #{tpu_custom_call.1} parent=1 // pred_fallthru
      _
    // Predicated region
    $region6: #{tpu_custom_call.1} parent=1 // pred_check
      _
    $region7: #{tpu_custom_call.1} parent=1 // pred_check_branch
      %23 = sbr.rel (0) target = $region9
    $region8: #{tpu_custom_call.1} parent=1 // pred_region
      _
    $region9: #{tpu_custom_call.1} parent=1 // pred_fallthru
      _
    // Predicated region
    $region10: #{tpu_custom_call.1} parent=1 // pred_check
      _
    $region11: #{tpu_custom_call.1} parent=1 // pred_check_branch
      %25 = sbr.rel (0) target = $region13
    $region12: #{tpu_custom_call.1} parent=1 // pred_region
      _
    $region13: #{tpu_custom_call.1} parent=1 // pred_fallthru
      _
    // Predicated region
    $region14: #{tpu_custom_call.1} parent=1 // pred_check
      _
    $region15: #{tpu_custom_call.1} parent=1 // pred_check_branch
      %27 = sbr.rel (0) target = $region17
    $region16: #{tpu_custom_call.1} parent=1 // pred_region
      _
    $region17: #{tpu_custom_call.1} parent=1 // pred_fallthru
      _
    // Predicated region
    $region18: #{tpu_custom_call.1} parent=1 // pred_check
      _
    $region19: #{tpu_custom_call.1} parent=1 // pred_check_branch
      %29 = sbr.rel (0) target = $region21
    $region20: #{tpu_custom_call.1} parent=1 // pred_region
      _
    $region21: #{tpu_custom_call.1} parent=1 // pred_fallthru
      _
    // Predicated region
    $region22: #{tpu_custom_call.1} parent=1 // pred_check
      _
    $region23: #{tpu_custom_call.1} parent=1 // pred_check_branch
      %31 = sbr.rel (0) target = $region25
    $region24: #{tpu_custom_call.1} parent=1 // pred_region
      %32 = dma.done [#allocation3], 128
    $region25: #{tpu_custom_call.1} parent=1 // pred_fallthru
      _
    %v33 = vld [vmem:[%s4] sm:$0x1]
    %v34 = vld [vmem:[#allocation2] sm:$0xff]
    %v35 = vld [vmem:[%s1] sm:$0xff]
    %v36 = vld [vmem:[%s1 + $0x8] sm:$0xff]
    %v38 = vlaneseq
    %v39 = vshrl.u32 %v38, 7
    %v40 = vsub.s32 0, %v39
    %v41 = vrot.slane %v33, %v40
    %vm43 = vcmask 130048
    %v45 = vsel %vm43, %v34, 0
    %47 = vmatprep.subr.mxu0 0.0
    %48 = vmatpush1.msra.mxu0 %v35
    %49 = vmatprep.subr.mxu0 0.0
    %50 = vmatpush1.msra.mxu0 %v36
    %51 = vmatprep.subr.mxu0 0.0
    %52 = vmatpush1.msra.mxu0 0.0
    %53 = vmatprep.subr.mxu0 0.0
    %54 = vmatpush1.msra.mxu0 0.0
    %55 = vmatprep.subr.mxu0 0.0
    %56 = vmatpush1.msra.mxu0 0.0
    %57 = vmatprep.subr.mxu0 0.0
    %58 = vmatpush1.msra.mxu0 0.0
    %59 = vmatprep.subr.mxu0 0.0
    %60 = vmatpush1.msra.mxu0 0.0
    %61 = vmatprep.subr.mxu0 0.0
    %62 = vmatpush1.msra.mxu0 0.0
    %63 = vmatprep.subr.mxu0 0.0
    %64 = vmatpush1.msra.mxu0 0.0
    %65 = vmatprep.subr.mxu0 0.0
    %66 = vmatpush1.msra.mxu0 0.0
    %67 = vmatprep.subr.mxu0 0.0
    %68 = vmatpush1.msra.mxu0 0.0
    %69 = vmatprep.subr.mxu0 0.0
    %70 = vmatpush1.msra.mxu0 0.0
    %71 = vmatprep.subr.mxu0 0.0
    %72 = vmatpush1.msra.mxu0 0.0
    %73 = vmatprep.subr.mxu0 0.0
    %74 = vmatpush1.msra.mxu0 0.0
    %75 = vmatprep.subr.mxu0 0.0
    %76 = vmatpush1.msra.mxu0 0.0
    %77 = vmatprep.subr.mxu0 0.0
    %78 = vmatpush1.msra.mxu0 0.0
    %79 = vmatprep.subr.mxu0 0.0
    %80 = vmatpush1.msra.mxu0 0.0
    %81 = vmatprep.subr.mxu0 0.0
    %82 = vmatpush1.msra.mxu0 0.0
    %83 = vmatprep.subr.mxu0 0.0
    %84 = vmatpush1.msra.mxu0 0.0
    %85 = vmatprep.subr.mxu0 0.0
    %86 = vmatpush1.msra.mxu0 0.0
    %87 = vmatprep.subr.mxu0 0.0
    %88 = vmatpush1.msra.mxu0 0.0
    %89 = vmatprep.subr.mxu0 0.0
    %90 = vmatpush1.msra.mxu0 0.0
    %91 = vmatprep.subr.mxu0 0.0
    %92 = vmatpush1.msra.mxu0 0.0
    %93 = vmatprep.subr.mxu0 0.0
    %94 = vmatpush1.msra.mxu0 0.0
    %95 = vmatprep.subr.mxu0 0.0
    %96 = vmatpush1.msra.mxu0 0.0
    %97 = vmatprep.subr.mxu0 0.0
    %98 = vmatpush1.msra.mxu0 0.0
    %99 = vmatprep.subr.mxu0 0.0
    %100 = vmatpush1.msra.mxu0 0.0
    %101 = vmatprep.subr.mxu0 0.0
    %102 = vmatpush1.msra.mxu0 0.0
    %103 = vmatprep.subr.mxu0 0.0
    %104 = vmatpush1.msra.mxu0 0.0
    %105 = vmatprep.subr.mxu0 0.0
    %106 = vmatpush1.msra.mxu0 0.0
    %107 = vmatprep.subr.mxu0 0.0
    %108 = vmatpush1.msra.mxu0 0.0
    %109 = vmatprep.subr.mxu0 0.0
    %110 = vmatpush1.msra.mxu0 0.0
    %111 = vmatprep.mubr.f32.mxu0 0.0
    %112 = vmatmul.mubr.f32.gmra.mrb[0].mxu0 %v45
    %v113 = vpop.f32.mrb[0].mxu0
    %v114 = vadd.f32 %v41, %v113
    %v115 = vpop.f32.mrb[0].mxu0
    %116 = vdwg.mxu0
    %v117 = vmax.f32 %v114, 0.0
    %v118 = vld [vmem:[%s2] sm:$0xff]
    %v119 = vld [vmem:[%s2 + $0x8] sm:$0xff]
    %v120 = vld [vmem:[%s2 + $0x10] sm:$0xff]
    %v121 = vld [vmem:[%s2 + $0x18] sm:$0xff]
    %122 = vrot.lane.b32.xlu0 %v41, 96
    %v123 = vpop.permute.xlu0 %122
    %vm125 = vcmask 261120
    %v127 = vsel %vm125, %v117, 0
    %129 = vmatprep.subr.mxu0 0.0
    %130 = vmatpush1.msra.mxu0 %v118
    %131 = vmatprep.subr.mxu0 0.0
    %132 = vmatpush1.msra.mxu0 %v119
    %133 = vmatprep.subr.mxu0 0.0
    %134 = vmatpush1.msra.mxu0 %v120
    %135 = vmatprep.subr.mxu0 0.0
    %136 = vmatpush1.msra.mxu0 %v121
    %137 = vmatprep.subr.mxu0 0.0
    %138 = vmatpush1.msra.mxu0 0.0
    %139 = vmatprep.subr.mxu0 0.0
    %140 = vmatpush1.msra.mxu0 0.0
    %141 = vmatprep.subr.mxu0 0.0
    %142 = vmatpush1.msra.mxu0 0.0
    %143 = vmatprep.subr.mxu0 0.0
    %144 = vmatpush1.msra.mxu0 0.0
    %145 = vmatprep.subr.mxu0 0.0
    %146 = vmatpush1.msra.mxu0 0.0
    %147 = vmatprep.subr.mxu0 0.0
    %148 = vmatpush1.msra.mxu0 0.0
    %149 = vmatprep.subr.mxu0 0.0
    %150 = vmatpush1.msra.mxu0 0.0
    %151 = vmatprep.subr.mxu0 0.0
    %152 = vmatpush1.msra.mxu0 0.0
    %153 = vmatprep.subr.mxu0 0.0
    %154 = vmatpush1.msra.mxu0 0.0
    %155 = vmatprep.subr.mxu0 0.0
    %156 = vmatpush1.msra.mxu0 0.0
    %157 = vmatprep.subr.mxu0 0.0
    %158 = vmatpush1.msra.mxu0 0.0
    %159 = vmatprep.subr.mxu0 0.0
    %160 = vmatpush1.msra.mxu0 0.0
    %161 = vmatprep.subr.mxu0 0.0
    %162 = vmatpush1.msra.mxu0 0.0
    %163 = vmatprep.subr.mxu0 0.0
    %164 = vmatpush1.msra.mxu0 0.0
    %165 = vmatprep.subr.mxu0 0.0
    %166 = vmatpush1.msra.mxu0 0.0
    %167 = vmatprep.subr.mxu0 0.0
    %168 = vmatpush1.msra.mxu0 0.0
    %169 = vmatprep.subr.mxu0 0.0
    %170 = vmatpush1.msra.mxu0 0.0
    %171 = vmatprep.subr.mxu0 0.0
    %172 = vmatpush1.msra.mxu0 0.0
    %173 = vmatprep.subr.mxu0 0.0
    %174 = vmatpush1.msra.mxu0 0.0
    %175 = vmatprep.subr.mxu0 0.0
    %176 = vmatpush1.msra.mxu0 0.0
    %177 = vmatprep.subr.mxu0 0.0
    %178 = vmatpush1.msra.mxu0 0.0
    %179 = vmatprep.subr.mxu0 0.0
    %180 = vmatpush1.msra.mxu0 0.0
    %181 = vmatprep.subr.mxu0 0.0
    %182 = vmatpush1.msra.mxu0 0.0
    %183 = vmatprep.subr.mxu0 0.0
    %184 = vmatpush1.msra.mxu0 0.0
    %185 = vmatprep.subr.mxu0 0.0
    %186 = vmatpush1.msra.mxu0 0.0
    %187 = vmatprep.subr.mxu0 0.0
    %188 = vmatpush1.msra.mxu0 0.0
    %189 = vmatprep.subr.mxu0 0.0
    %190 = vmatpush1.msra.mxu0 0.0
    %191 = vmatprep.subr.mxu0 0.0
    %192 = vmatpush1.msra.mxu0 0.0
    %193 = vmatprep.mubr.f32.mxu0 0.0
    %194 = vmatmul.mubr.f32.gmra.mrb[0].mxu0 %v127
    %v195 = vpop.f32.mrb[0].mxu0
    %v196 = vadd.f32 %v123, %v195
    %v197 = vpop.f32.mrb[0].mxu0
    %198 = vdwg.mxu0
    %v199 = vmax.f32 %v196, 0.0
    %v200 = vld [vmem:[%s3] sm:$0xff]
    %v201 = vld [vmem:[%s3 + $0x8] sm:$0xff]
    %v202 = vld [vmem:[%s3 + $0x10] sm:$0xff]
    %v203 = vld [vmem:[%s3 + $0x18] sm:$0xff]
    %204 = vrot.lane.b32.xlu0 %v41, 64
    %v205 = vpop.permute.xlu0 %204
    %v208 = vsel %vm125, %v199, 0
    %210 = vmatprep.subr.mxu0 0.0
    %211 = vmatpush1.msra.mxu0 %v200
    %212 = vmatprep.subr.mxu0 0.0
    %213 = vmatpush1.msra.mxu0 %v201
    %214 = vmatprep.subr.mxu0 0.0
    %215 = vmatpush1.msra.mxu0 %v202
    %216 = vmatprep.subr.mxu0 0.0
    %217 = vmatpush1.msra.mxu0 %v203
    %218 = vmatprep.subr.mxu0 0.0
    %219 = vmatpush1.msra.mxu0 0.0
    %220 = vmatprep.subr.mxu0 0.0
    %221 = vmatpush1.msra.mxu0 0.0
    %222 = vmatprep.subr.mxu0 0.0
    %223 = vmatpush1.msra.mxu0 0.0
    %224 = vmatprep.subr.mxu0 0.0
    %225 = vmatpush1.msra.mxu0 0.0
    %226 = vmatprep.subr.mxu0 0.0
    %227 = vmatpush1.msra.mxu0 0.0
    %228 = vmatprep.subr.mxu0 0.0
    %229 = vmatpush1.msra.mxu0 0.0
    %230 = vmatprep.subr.mxu0 0.0
    %231 = vmatpush1.msra.mxu0 0.0
    %232 = vmatprep.subr.mxu0 0.0
    %233 = vmatpush1.msra.mxu0 0.0
    %234 = vmatprep.subr.mxu0 0.0
    %235 = vmatpush1.msra.mxu0 0.0
    %236 = vmatprep.subr.mxu0 0.0
    %237 = vmatpush1.msra.mxu0 0.0
    %238 = vmatprep.subr.mxu0 0.0
    %239 = vmatpush1.msra.mxu0 0.0
    %240 = vmatprep.subr.mxu0 0.0
    %241 = vmatpush1.msra.mxu0 0.0
    %242 = vmatprep.subr.mxu0 0.0
    %243 = vmatpush1.msra.mxu0 0.0
    %244 = vmatprep.subr.mxu0 0.0
    %245 = vmatpush1.msra.mxu0 0.0
    %246 = vmatprep.subr.mxu0 0.0
    %247 = vmatpush1.msra.mxu0 0.0
    %248 = vmatprep.subr.mxu0 0.0
    %249 = vmatpush1.msra.mxu0 0.0
    %250 = vmatprep.subr.mxu0 0.0
    %251 = vmatpush1.msra.mxu0 0.0
    %252 = vmatprep.subr.mxu0 0.0
    %253 = vmatpush1.msra.mxu0 0.0
    %254 = vmatprep.subr.mxu0 0.0
    %255 = vmatpush1.msra.mxu0 0.0
    %256 = vmatprep.subr.mxu0 0.0
    %257 = vmatpush1.msra.mxu0 0.0
    %258 = vmatprep.subr.mxu0 0.0
    %259 = vmatpush1.msra.mxu0 0.0
    %260 = vmatprep.subr.mxu0 0.0
    %261 = vmatpush1.msra.mxu0 0.0
    %262 = vmatprep.subr.mxu0 0.0
    %263 = vmatpush1.msra.mxu0 0.0
    %264 = vmatprep.subr.mxu0 0.0
    %265 = vmatpush1.msra.mxu0 0.0
    %266 = vmatprep.subr.mxu0 0.0
    %267 = vmatpush1.msra.mxu0 0.0
    %268 = vmatprep.subr.mxu0 0.0
    %269 = vmatpush1.msra.mxu0 0.0
    %270 = vmatprep.subr.mxu0 0.0
    %271 = vmatpush1.msra.mxu0 0.0
    %272 = vmatprep.subr.mxu0 0.0
    %273 = vmatpush1.msra.mxu0 0.0
    %274 = vmatprep.mubr.f32.mxu0 0.0
    %275 = vmatmul.mubr.f32.gmra.mrb[0].mxu0 %v208
    %v276 = vpop.f32.mrb[0].mxu0
    %v277 = vadd.f32 %v205, %v276
    %v278 = vpop.f32.mrb[0].mxu0
    %279 = vdwg.mxu0
    %v280 = vmax.f32 %v277, 0.0
    %vm281 = vcmask 64512
    %v282 = vsel %vm281, %v277, %v280
    %283 = vst.msk [vmem:[#allocation5] sm:$0xff] %vm43, %v282
    // Predicated region
    $region26: #{tpu_custom_call.1} parent=1 // pred_check
      _
    $region27: #{tpu_custom_call.1} parent=1 // pred_check_branch
      %285 = sbr.rel (0) target = $region29
    $region28: #{tpu_custom_call.1} parent=1 // pred_region
      %s287 = ssub.s32 128, 128
      %288 = vsyncadd [#allocation4], %s287
      %s290 = sshll.u32 [#allocation5], 4
      %s291 = int_to_ptr.vmem [resolvable:$true] %s290
      %293 = dma.vmem_to_hbm [thread:$0]  %s291, 128, %s5, [#allocation4]
    $region29: #{tpu_custom_call.1} parent=1 // pred_fallthru
      _
    // Predicated region
    $region30: #{tpu_custom_call.1} parent=1 // pred_check
      _
    $region31: #{tpu_custom_call.1} parent=1 // pred_check_branch
      %295 = sbr.rel (0) target = $region33
    $region32: #{tpu_custom_call.1} parent=1 // pred_region
      %296 = dma.done [#allocation4], 128
    $region33: #{tpu_custom_call.1} parent=1 // pred_fallthru
      _
    %297 = vsyncpa [#allocation3], 1
    %298 = vsyncpa [#allocation4], 1

</llo_original>
